<compile_context>
chip_gen: v6e
topology: v6e:2x2x1
jax: 0.10.0
libtpu: 0.0.40
codegen_flags: <defaults>
</compile_context>

<pallas_src>
from functools import partial

import jax
import jax.numpy as jnp
from jax.experimental import pallas as pl
from jax.experimental.pallas import tpu as pltpu

TB = 512  # batch tile on the lane axis (multiple of 128)


def _round_up(x, m):
    return ((x + m - 1) // m) * m


def _make_mf_kernel(tb, num_users, num_items, is_training):
    """Kernel body.  tb / num_users / num_items are static Python ints."""

    def kernel(uidx_ref, iidx_ref, wt_ref, ht_ref, out_ref, *train_refs):
        uidx = uidx_ref[...]            # (1, tb) int32, batch on lanes
        iidx = iidx_ref[...]            # (1, tb) int32
        wt = wt_ref[...]                # (Kp, num_users)  VMEM-resident
        ht = ht_ref[...]                # (Kp, num_items)  VMEM-resident

        # ---- one-hot gather on the MXU (exact: each column selects one row) ----
        iota_u = jax.lax.broadcasted_iota(jnp.int32, (num_users, tb), 0)
        onehot_u = (iota_u == uidx).astype(wt.dtype)                   # (NU, tb)
        u_t = jnp.dot(wt, onehot_u,
                      preferred_element_type=jnp.float32,
                      precision=jax.lax.Precision.HIGHEST)             # (Kp, tb)

        iota_i = jax.lax.broadcasted_iota(jnp.int32, (num_items, tb), 0)
        onehot_i = (iota_i == iidx).astype(ht.dtype)                   # (NI, tb)
        v_t = jnp.dot(ht, onehot_i,
                      preferred_element_type=jnp.float32,
                      precision=jax.lax.Precision.HIGHEST)             # (Kp, tb)

        # ---- dot product over K (padded rows are zero) + sigmoid ----
        logits = jnp.sum(u_t * v_t, axis=0, keepdims=True)             # (1, tb)
        out_ref[...] = jax.nn.sigmoid(logits).astype(out_ref.dtype)    # lane-dense store

        if is_training:
            u_out, v_out = train_refs
            u_out[...] = u_t.astype(u_out.dtype)                       # (Kp, tb)
            v_out[...] = v_t.astype(v_out.dtype)

    return kernel


@partial(jax.jit, static_argnames=("is_training", "tb"))
def mf_forward(W, H, x, is_training=False, tb=TB):
    """Pallas equivalent of MF_BaseModel.forward.

    W: (num_users, K) float embedding table
    H: (num_items, K) float embedding table
    x: (B, 2) integer array of [user_idx, item_idx] pairs
    """
    assert tb % 128 == 0
    B = x.shape[0]
    num_users, K = W.shape
    num_items, K2 = H.shape
    assert K == K2
    emb_dtype = W.dtype

    # Batch tile / padding: batch lives on the lane axis (multiple of 128).
    tb = min(tb, _round_up(B, 128))
    b_pad = _round_up(B, tb)
    num_tiles = b_pad // tb

    # Pad the embedding dim to a sublane multiple; zero rows don't change the
    # K-reduction and are sliced off the training outputs in the wrapper.
    K_pad = _round_up(K, 8)

    # Indices, lane-major (1, b_pad).  Pad value 0 is a valid row; padded lanes
    # produce garbage logits that the wrapper slices away.
    uidx = jnp.pad(x[:, 0].astype(jnp.int32), (0, b_pad - B)).reshape(1, b_pad)
    iidx = jnp.pad(x[:, 1].astype(jnp.int32), (0, b_pad - B)).reshape(1, b_pad)

    # Transposed, K-padded tables: (K_pad, N) -> ~2x sublane padding in VMEM.
    Wt = jnp.pad(W.T, ((0, K_pad - K), (0, 0)))
    Ht = jnp.pad(H.T, ((0, K_pad - K), (0, 0)))

    in_specs = [
        pl.BlockSpec((1, tb), lambda i: (0, i)),              # user indices
        pl.BlockSpec((1, tb), lambda i: (0, i)),              # item indices
        pl.BlockSpec((K_pad, num_users), lambda i: (0, 0)),   # W^T (resident)
        pl.BlockSpec((K_pad, num_items), lambda i: (0, 0)),   # H^T (resident)
    ]

    out_shape = (jax.ShapeDtypeStruct((1, b_pad), jnp.float32),)
    out_specs = (pl.BlockSpec((1, tb), lambda i: (0, i)),)
    if is_training:
        out_shape = out_shape + (
            jax.ShapeDtypeStruct((K_pad, b_pad), emb_dtype),
            jax.ShapeDtypeStruct((K_pad, b_pad), emb_dtype),
        )
        out_specs = out_specs + (
            pl.BlockSpec((K_pad, tb), lambda i: (0, i)),
            pl.BlockSpec((K_pad, tb), lambda i: (0, i)),
        )

    results = pl.pallas_call(
        _make_mf_kernel(tb, num_users, num_items, is_training),
        grid=(num_tiles,),
        in_specs=in_specs,
        out_specs=out_specs,
        out_shape=out_shape,
        compiler_params=pltpu.CompilerParams(dimension_semantics=("parallel",)),
    )(uidx, iidx, Wt, Ht)

    out = results[0][0, :B]
    if is_training:
        U_emb = results[1][:K, :B].T   # back to PyTorch (B, K) layout
        V_emb = results[2][:K, :B].T
        return out, U_emb, V_emb
    return out


if __name__ == "__main__":
    # Small deterministic setup consistent with MF_BaseModel.__init__:
    num_users, num_items, embedding_k = 16, 24, 4
    batch = 10  # exercises the padded-lane tail (B < 128)

    key = jax.random.PRNGKey(0)
    kW, kH, ku, ki = jax.random.split(key, 4)
    # nn.Embedding default init: N(0, 1)
    W = jax.random.normal(kW, (num_users, embedding_k), dtype=jnp.float32)
    H = jax.random.normal(kH, (num_items, embedding_k), dtype=jnp.float32)

    user_idx = jax.random.randint(ku, (batch,), 0, num_users, dtype=jnp.int32)
    item_idx = jax.random.randint(ki, (batch,), 0, num_items, dtype=jnp.int32)
    x = jnp.stack([user_idx, item_idx], axis=1)  # (B, 2)

    # Training path: (out, U_emb, V_emb).
    out, U_emb, V_emb = mf_forward(W, H, x, is_training=True)
    out = jax.block_until_ready(out)

    # Inference path: separate kernel variant without the U/V writeback.
    out_inf = jax.block_until_ready(mf_forward(W, H, x, is_training=False))

    # Pure-JAX reference check.
    U_ref = W[x[:, 0]]
    V_ref = H[x[:, 1]]
    out_ref = jax.nn.sigmoid(jnp.sum(U_ref * V_ref, axis=1))

    assert out.shape == (batch,)
    assert U_emb.shape == (batch, embedding_k)
    assert V_emb.shape == (batch, embedding_k)
    assert jnp.allclose(out, out_ref, atol=1e-5, rtol=1e-5)
    assert jnp.allclose(out_inf, out_ref, atol=1e-5, rtol=1e-5)
    assert jnp.allclose(U_emb, U_ref, atol=1e-5, rtol=1e-5)  # one-hot gather is exact
    assert jnp.allclose(V_emb, V_ref, atol=1e-5, rtol=1e-5)

    print("KERNEL_OK")
</pallas_src>

<mosaic_0001>
module attributes {stable_mosaic.version = 11 : i64} {
  func.func @kernel(%arg0: i32, %arg1: memref<1x128xi32, #tpu.memory_space<vmem>>, %arg2: memref<1x128xi32, #tpu.memory_space<vmem>>, %arg3: memref<8x16xf32, #tpu.memory_space<vmem>>, %arg4: memref<8x24xf32, #tpu.memory_space<vmem>>, %arg5: memref<1x128xf32, #tpu.memory_space<vmem>>, %arg6: memref<8x128xf32, #tpu.memory_space<vmem>>, %arg7: memref<8x128xf32, #tpu.memory_space<vmem>>) attributes {dimension_semantics = [#tpu.dimension_semantics<parallel>], iteration_bounds = array<i64: 1>, scalar_prefetch = 0 : i64, scratch_operands = 0 : i64, tpu.core_type = #tpu.core_type<tc>, window_params = [{transform_indices = @transform_0, window_bounds = array<i64: 1, 128>}, {transform_indices = @transform_1, window_bounds = array<i64: 1, 128>}, {pipeline_mode = #tpu.pipeline_mode<synchronous>, transform_indices = @transform_2, window_bounds = array<i64: 8, 16>}, {pipeline_mode = #tpu.pipeline_mode<synchronous>, transform_indices = @transform_3, window_bounds = array<i64: 8, 24>}, {transform_indices = @transform_4, window_bounds = array<i64: 1, 128>}, {transform_indices = @transform_5, window_bounds = array<i64: 8, 128>}, {transform_indices = @transform_6, window_bounds = array<i64: 8, 128>}]} {
    %c0 = arith.constant 0 : index
    %c0_0 = arith.constant 0 : index
    %0 = vector.load %arg1[%c0, %c0_0] : memref<1x128xi32, #tpu.memory_space<vmem>>, vector<1x128xi32>
    %c0_1 = arith.constant 0 : index
    %c0_2 = arith.constant 0 : index
    %1 = vector.load %arg2[%c0_1, %c0_2] : memref<1x128xi32, #tpu.memory_space<vmem>>, vector<1x128xi32>
    %c0_3 = arith.constant 0 : index
    %c0_4 = arith.constant 0 : index
    %2 = vector.load %arg3[%c0_3, %c0_4] : memref<8x16xf32, #tpu.memory_space<vmem>>, vector<8x16xf32>
    %c0_5 = arith.constant 0 : index
    %c0_6 = arith.constant 0 : index
    %3 = vector.load %arg4[%c0_5, %c0_6] : memref<8x24xf32, #tpu.memory_space<vmem>>, vector<8x24xf32>
    %4 = tpu.iota {dimensions = array<i32: 0>} : vector<16x128xi32>
    %5 = vector.broadcast %0 : vector<1x128xi32> to vector<16x128xi32>
    %6 = arith.cmpi eq, %4, %5 : vector<16x128xi32>
    %7 = arith.extui %6 : vector<16x128xi1> to vector<16x128xi32>
    %8 = arith.sitofp %7 : vector<16x128xi32> to vector<16x128xf32>
    %cst = arith.constant dense<0.000000e+00> : vector<8x128xf32>
    %9 = tpu.matmul %2, %8, %cst {dimension_numbers = #tpu.dot_dimension_numbers<[1], [0], [0], [1], [0, 0, 1, 1], [], []>, precision = #tpu.contract_precision<fp32>} : vector<8x16xf32>, vector<16x128xf32>, vector<8x128xf32> -> vector<8x128xf32>
    %10 = tpu.iota {dimensions = array<i32: 0>} : vector<24x128xi32>
    %11 = vector.broadcast %1 : vector<1x128xi32> to vector<24x128xi32>
    %12 = arith.cmpi eq, %10, %11 : vector<24x128xi32>
    %13 = arith.extui %12 : vector<24x128xi1> to vector<24x128xi32>
    %14 = arith.sitofp %13 : vector<24x128xi32> to vector<24x128xf32>
    %cst_7 = arith.constant dense<0.000000e+00> : vector<8x128xf32>
    %15 = tpu.matmul %3, %14, %cst_7 {dimension_numbers = #tpu.dot_dimension_numbers<[1], [0], [0], [1], [0, 0, 1, 1], [], []>, precision = #tpu.contract_precision<fp32>} : vector<8x24xf32>, vector<24x128xf32>, vector<8x128xf32> -> vector<8x128xf32>
    %16 = arith.mulf %9, %15 : vector<8x128xf32>
    %cst_8 = arith.constant dense<0.000000e+00> : vector<128xf32>
    %17 = vector.multi_reduction <add>, %16, %cst_8 [0] : vector<8x128xf32> to vector<128xf32>
    %18 = vector.shape_cast %17 : vector<128xf32> to vector<1x128xf32>
    %19 = arith.negf %18 : vector<1x128xf32>
    %20 = math.exp %19 : vector<1x128xf32>
    %cst_9 = arith.constant 1.000000e+00 : f32
    %21 = vector.broadcast %cst_9 : f32 to vector<1x128xf32>
    %22 = arith.addf %21, %20 : vector<1x128xf32>
    %23 = arith.divf %21, %22 : vector<1x128xf32>
    %c0_10 = arith.constant 0 : index
    %c0_11 = arith.constant 0 : index
    %24 = vector.load %arg5[%c0_10, %c0_11] : memref<1x128xf32, #tpu.memory_space<vmem>>, vector<1x128xf32>
    tpu.vector_store %arg5[%c0_10, %c0_11], %23 {strides = array<i32>} : memref<1x128xf32, #tpu.memory_space<vmem>>, vector<1x128xf32>,
    %c0_12 = arith.constant 0 : index
    %c0_13 = arith.constant 0 : index
    %25 = vector.load %arg6[%c0_12, %c0_13] : memref<8x128xf32, #tpu.memory_space<vmem>>, vector<8x128xf32>
    tpu.vector_store %arg6[%c0_12, %c0_13], %9 {strides = array<i32>} : memref<8x128xf32, #tpu.memory_space<vmem>>, vector<8x128xf32>,
    %c0_14 = arith.constant 0 : index
    %c0_15 = arith.constant 0 : index
    %26 = vector.load %arg7[%c0_14, %c0_15] : memref<8x128xf32, #tpu.memory_space<vmem>>, vector<8x128xf32>
    tpu.vector_store %arg7[%c0_14, %c0_15], %15 {strides = array<i32>} : memref<8x128xf32, #tpu.memory_space<vmem>>, vector<8x128xf32>,
    return
  }
  func.func @transform_0(%arg0: i32) -> (i32, i32) {
    %c0_i32 = arith.constant 0 : i32
    %c0_i32_0 = arith.constant 0 : i32
    return %c0_i32, %arg0 : i32, i32
  }
  func.func @transform_1(%arg0: i32) -> (i32, i32) {
    %c0_i32 = arith.constant 0 : i32
    %c0_i32_0 = arith.constant 0 : i32
    return %c0_i32, %arg0 : i32, i32
  }
  func.func @transform_2(%arg0: i32) -> (i32, i32) {
    %c0_i32 = arith.constant 0 : i32
    %c0_i32_0 = arith.constant 0 : i32
    %c0_i32_1 = arith.constant 0 : i32
    return %c0_i32, %c0_i32_0 : i32, i32
  }
  func.func @transform_3(%arg0: i32) -> (i32, i32) {
    %c0_i32 = arith.constant 0 : i32
    %c0_i32_0 = arith.constant 0 : i32
    %c0_i32_1 = arith.constant 0 : i32
    return %c0_i32, %c0_i32_0 : i32, i32
  }
  func.func @transform_4(%arg0: i32) -> (i32, i32) {
    %c0_i32 = arith.constant 0 : i32
    %c0_i32_0 = arith.constant 0 : i32
    return %c0_i32, %arg0 : i32, i32
  }
  func.func @transform_5(%arg0: i32) -> (i32, i32) {
    %c0_i32 = arith.constant 0 : i32
    %c0_i32_0 = arith.constant 0 : i32
    return %c0_i32, %arg0 : i32, i32
  }
  func.func @transform_6(%arg0: i32) -> (i32, i32) {
    %c0_i32 = arith.constant 0 : i32
    %c0_i32_0 = arith.constant 0 : i32
    return %c0_i32, %arg0 : i32, i32
  }
}

</mosaic_0001>

<llo_original>
// kernel: mf_forward.1
$region0: #{mf_forward.1}
  #allocation0 [shape = 'u32[]', space=smem, size = 0x4, offset = 0x4, fixed_abs, tag = 'smem constant byte address 0x4 - core index']
  #allocation1 [shape = 'u32[144,128]{1,0:T(1,128)}', space=vmem, size = 0x12000, scoped, tag = 'internal scratch']
  %s0 = inlined_call_operand.vmem [shape: s32[1,128], index: 0, kind: input, shape index: {}]
  %s1 = inlined_call_operand.vmem [shape: s32[1,128], index: 1, kind: input, shape index: {}]
  %s2 = inlined_call_operand.vmem [shape: f32[8,16], index: 2, kind: input, shape index: {}]
  %s3 = inlined_call_operand.vmem [shape: f32[8,24], index: 3, kind: input, shape index: {}]
  %s4 = inlined_call_operand.vmem [shape: f32[1,128], index: 4, kind: output, shape index: {0}]
  %s5 = inlined_call_operand.vmem [shape: f32[8,128], index: 5, kind: output, shape index: {1}]
  %s6 = inlined_call_operand.vmem [shape: f32[8,128], index: 6, kind: output, shape index: {2}]
  %7 = xla_tuple %s4, %s5, %s6
  %s8 = sld [smem:[#allocation0]]
  $region42: #{mf_forward.1} parent=0
    _
  %s10 = ssub.s32 1, %s8
  %s11 = scalar_select 0, %s10, %s8
  // Predicated region
  $region2: #{mf_forward.1} parent=0 // pred_check
    _
  $region3: #{mf_forward.1} parent=0 // pred_check_branch
    %13 = sbr.rel (0) target = $region5
  $region4: #{mf_forward.1} parent=0 // pred_region
    _
  $region5: #{mf_forward.1} parent=0 // pred_fallthru
    _
  // Predicated region
  $region6: #{mf_forward.1} parent=0 // pred_check
    _
  $region7: #{mf_forward.1} parent=0 // pred_check_branch
    %15 = sbr.rel (0) target = $region9
  $region8: #{mf_forward.1} parent=0 // pred_region
    _
  $region9: #{mf_forward.1} parent=0 // pred_fallthru
    _
  // Predicated region
  $region10: #{mf_forward.1} parent=0 // pred_check
    _
  $region11: #{mf_forward.1} parent=0 // pred_check_branch
    %17 = sbr.rel (0) target = $region13
  $region12: #{mf_forward.1} parent=0 // pred_region
    _
  $region13: #{mf_forward.1} parent=0 // pred_fallthru
    _
  // Predicated region
  $region14: #{mf_forward.1} parent=0 // pred_check
    _
  $region15: #{mf_forward.1} parent=0 // pred_check_branch
    %19 = sbr.rel (0) target = $region17
  $region16: #{mf_forward.1} parent=0 // pred_region
    _
  $region17: #{mf_forward.1} parent=0 // pred_fallthru
    _
  %v20 = vld [vmem:[%s0] sm:$0x1]
  %v21 = vld [vmem:[%s1] sm:$0x1]
  %v22 = vld [vmem:[%s2] sm:$0xff]
  %v23 = vld [vmem:[%s3] sm:$0xff]
  %v24 = vlaneseq
  %v25 = vshrl.u32 %v24, 7
  %v26 = vadd.s32 %v25, 8
  %v27 = vlaneseq
  %v28 = vshrl.u32 %v27, 7
  %v29 = vsub.s32 0, %v28
  %v30 = vrot.slane %v20, %v29
  %vm31 = vcmp.eq.s32.totalorder %v25, %v30
  %vm32 = vcmp.eq.s32.totalorder %v26, %v30
  %v33 = vsel %vm31, 1, 0
  %v34 = vsel %vm32, 1, 0
  %v35 = vcvt.s32.f32 %v33
  %v36 = vcvt.s32.f32 %v34
  %vm37 = vcmask 130048
  %v39 = vsel %vm37, %v22, 0
  %41 = vmatprep.subr.mxu0 0.0
  %42 = vmatpush1.msra.mxu0 0.0
  %43 = vmatprep.subr.mxu0 0.0
  %44 = vmatpush1.msra.mxu0 0.0
  %45 = vmatprep.subr.mxu0 0.0
  %46 = vmatpush1.msra.mxu0 0.0
  %47 = vmatprep.subr.mxu0 0.0
  %48 = vmatpush1.msra.mxu0 0.0
  %49 = vmatprep.subr.mxu0 0.0
  %50 = vmatpush1.msra.mxu0 0.0
  %51 = vmatprep.subr.mxu0 0.0
  %52 = vmatpush1.msra.mxu0 0.0
  %53 = vmatprep.subr.mxu0 0.0
  %54 = vmatpush1.msra.mxu0 0.0
  %55 = vmatprep.subr.mxu0 0.0
  %56 = vmatpush1.msra.mxu0 0.0
  %57 = vmatprep.subr.mxu0 0.0
  %58 = vmatpush1.msra.mxu0 0.0
  %59 = vmatprep.subr.mxu0 0.0
  %60 = vmatpush1.msra.mxu0 0.0
  %61 = vmatprep.subr.mxu0 0.0
  %62 = vmatpush1.msra.mxu0 0.0
  %63 = vmatprep.subr.mxu0 0.0
  %64 = vmatpush1.msra.mxu0 0.0
  %65 = vmatprep.subr.mxu0 0.0
  %66 = vmatpush1.msra.mxu0 0.0
  %67 = vmatprep.subr.mxu0 0.0
  %68 = vmatpush1.msra.mxu0 0.0
  %69 = vmatprep.subr.mxu0 0.0
  %v70 = vand.u32 %v36, 4294901760
  %71 = vmatpush1.msra.mxu0 %v70
  %72 = vmatprep.subr.mxu0 0.0
  %v73 = vand.u32 %v35, 4294901760
  %74 = vmatpush1.msra.mxu0 %v73
  %75 = vmatprep.subr.mxu0 0.0
  %76 = vmatpush2.msra.mxu0 0.0
  %77 = vmatprep.subr.mxu0 0.0
  %78 = vmatpush2.msra.mxu0 0.0
  %79 = vmatprep.subr.mxu0 0.0
  %80 = vmatpush2.msra.mxu0 0.0
  %81 = vmatprep.subr.mxu0 0.0
  %82 = vmatpush2.msra.mxu0 0.0
  %83 = vmatprep.subr.mxu0 0.0
  %84 = vmatpush2.msra.mxu0 0.0
  %85 = vmatprep.subr.mxu0 0.0
  %86 = vmatpush2.msra.mxu0 0.0
  %87 = vmatprep.subr.mxu0 0.0
  %88 = vmatpush2.msra.mxu0 0.0
  %89 = vmatprep.subr.mxu0 0.0
  %90 = vmatpush2.msra.mxu0 0.0
  %91 = vmatprep.subr.mxu0 0.0
  %92 = vmatpush2.msra.mxu0 0.0
  %93 = vmatprep.subr.mxu0 0.0
  %94 = vmatpush2.msra.mxu0 0.0
  %95 = vmatprep.subr.mxu0 0.0
  %96 = vmatpush2.msra.mxu0 0.0
  %97 = vmatprep.subr.mxu0 0.0
  %98 = vmatpush2.msra.mxu0 0.0
  %99 = vmatprep.subr.mxu0 0.0
  %100 = vmatpush2.msra.mxu0 0.0
  %101 = vmatprep.subr.mxu0 0.0
  %102 = vmatpush2.msra.mxu0 0.0
  %103 = vmatprep.subr.mxu0 0.0
  %104 = vmatpush2.msra.mxu0 0.0
  %105 = vmatprep.subr.mxu0 0.0
  %106 = vmatpush2.msra.mxu0 0.0
  %107 = vmatprep.mubr.f32.mxu0 0.0
  %v108 = vand.u32 %v39, 4294901760
  %v109 = vsub.f32 %v39, %v108
  %v110 = vand.u32 %v109, 4294901760
  %v111 = vsub.f32 %v109, %v110
  %v112 = vand.u32 %v111, 4294901760
  %113 = vmatmul.mubr.f32.gmra.mxu0 %v112
  %v114 = vpop.f32.mrf.mxu0
  %v115 = vadd.f32 0.0, %v114
  %v116 = vpop.f32.mrf.mxu0
  %117 = vdwg.mxu0
  %118 = vmatprep.subr.mxu0 0.0
  %119 = vmatpush1.msra.mxu0 0.0
  %120 = vmatprep.subr.mxu0 0.0
  %121 = vmatpush1.msra.mxu0 0.0
  %122 = vmatprep.subr.mxu0 0.0
  %123 = vmatpush1.msra.mxu0 0.0
  %124 = vmatprep.subr.mxu0 0.0
  %125 = vmatpush1.msra.mxu0 0.0
  %126 = vmatprep.subr.mxu0 0.0
  %127 = vmatpush1.msra.mxu0 0.0
  %128 = vmatprep.subr.mxu0 0.0
  %129 = vmatpush1.msra.mxu0 0.0
  %130 = vmatprep.subr.mxu0 0.0
  %131 = vmatpush1.msra.mxu0 0.0
  %132 = vmatprep.subr.mxu0 0.0
  %133 = vmatpush1.msra.mxu0 0.0
  %134 = vmatprep.subr.mxu0 0.0
  %135 = vmatpush1.msra.mxu0 0.0
  %136 = vmatprep.subr.mxu0 0.0
  %137 = vmatpush1.msra.mxu0 0.0
  %138 = vmatprep.subr.mxu0 0.0
  %139 = vmatpush1.msra.mxu0 0.0
  %140 = vmatprep.subr.mxu0 0.0
  %141 = vmatpush1.msra.mxu0 0.0
  %142 = vmatprep.subr.mxu0 0.0
  %143 = vmatpush1.msra.mxu0 0.0
  %144 = vmatprep.subr.mxu0 0.0
  %145 = vmatpush1.msra.mxu0 0.0
  %146 = vmatprep.subr.mxu0 0.0
  %v147 = vand.u32 %v36, 4294901760
  %v148 = vsub.f32 %v36, %v147
  %v149 = vand.u32 %v148, 4294901760
  %v150 = vsub.f32 %v148, %v149
  %v151 = vand.u32 %v150, 4294901760
  %152 = vmatpush1.msra.mxu0 %v151
  %153 = vmatprep.subr.mxu0 0.0
  %v154 = vand.u32 %v35, 4294901760
  %v155 = vsub.f32 %v35, %v154
  %v156 = vand.u32 %v155, 4294901760
  %v157 = vsub.f32 %v155, %v156
  %v158 = vand.u32 %v157, 4294901760
  %159 = vmatpush1.msra.mxu0 %v158
  %160 = vmatprep.subr.mxu0 0.0
  %161 = vmatpush2.msra.mxu0 0.0
  %162 = vmatprep.subr.mxu0 0.0
  %163 = vmatpush2.msra.mxu0 0.0
  %164 = vmatprep.subr.mxu0 0.0
  %165 = vmatpush2.msra.mxu0 0.0
  %166 = vmatprep.subr.mxu0 0.0
  %167 = vmatpush2.msra.mxu0 0.0
  %168 = vmatprep.subr.mxu0 0.0
  %169 = vmatpush2.msra.mxu0 0.0
  %170 = vmatprep.subr.mxu0 0.0
  %171 = vmatpush2.msra.mxu0 0.0
  %172 = vmatprep.subr.mxu0 0.0
  %173 = vmatpush2.msra.mxu0 0.0
  %174 = vmatprep.subr.mxu0 0.0
  %175 = vmatpush2.msra.mxu0 0.0
  %176 = vmatprep.subr.mxu0 0.0
  %177 = vmatpush2.msra.mxu0 0.0
  %178 = vmatprep.subr.mxu0 0.0
  %179 = vmatpush2.msra.mxu0 0.0
  %180 = vmatprep.subr.mxu0 0.0
  %181 = vmatpush2.msra.mxu0 0.0
  %182 = vmatprep.subr.mxu0 0.0
  %183 = vmatpush2.msra.mxu0 0.0
  %184 = vmatprep.subr.mxu0 0.0
  %185 = vmatpush2.msra.mxu0 0.0
  %186 = vmatprep.subr.mxu0 0.0
  %187 = vmatpush2.msra.mxu0 0.0
  %188 = vmatprep.subr.mxu0 0.0
  %189 = vmatpush2.msra.mxu0 0.0
  %190 = vmatprep.subr.mxu0 0.0
  %191 = vmatpush2.msra.mxu0 0.0
  %192 = vmatprep.mubr.f32.mxu0 0.0
  %v193 = vand.u32 %v39, 4294901760
  %194 = vmatmul.mubr.f32.gmra.mxu0 %v193
  %v195 = vpop.f32.mrf.mxu0
  %v196 = vadd.f32 %v115, %v195
  %v197 = vpop.f32.mrf.mxu0
  %198 = vdwg.mxu0
  %199 = vmatprep.subr.mxu0 0.0
  %200 = vmatpush1.msra.mxu0 0.0
  %201 = vmatprep.subr.mxu0 0.0
  %202 = vmatpush1.msra.mxu0 0.0
  %203 = vmatprep.subr.mxu0 0.0
  %204 = vmatpush1.msra.mxu0 0.0
  %205 = vmatprep.subr.mxu0 0.0
  %206 = vmatpush1.msra.mxu0 0.0
  %207 = vmatprep.subr.mxu0 0.0
  %208 = vmatpush1.msra.mxu0 0.0
  %209 = vmatprep.subr.mxu0 0.0
  %210 = vmatpush1.msra.mxu0 0.0
  %211 = vmatprep.subr.mxu0 0.0
  %212 = vmatpush1.msra.mxu0 0.0
  %213 = vmatprep.subr.mxu0 0.0
  %214 = vmatpush1.msra.mxu0 0.0
  %215 = vmatprep.subr.mxu0 0.0
  %216 = vmatpush1.msra.mxu0 0.0
  %217 = vmatprep.subr.mxu0 0.0
  %218 = vmatpush1.msra.mxu0 0.0
  %219 = vmatprep.subr.mxu0 0.0
  %220 = vmatpush1.msra.mxu0 0.0
  %221 = vmatprep.subr.mxu0 0.0
  %222 = vmatpush1.msra.mxu0 0.0
  %223 = vmatprep.subr.mxu0 0.0
  %224 = vmatpush1.msra.mxu0 0.0
  %225 = vmatprep.subr.mxu0 0.0
  %226 = vmatpush1.msra.mxu0 0.0
  %227 = vmatprep.subr.mxu0 0.0
  %v228 = vand.u32 %v36, 4294901760
  %v229 = vsub.f32 %v36, %v228
  %230 = vmatpush1.msra.mxu0 %v229
  %231 = vmatprep.subr.mxu0 0.0
  %v232 = vand.u32 %v35, 4294901760
  %v233 = vsub.f32 %v35, %v232
  %234 = vmatpush1.msra.mxu0 %v233
  %235 = vmatprep.subr.mxu0 0.0
  %236 = vmatpush2.msra.mxu0 0.0
  %237 = vmatprep.subr.mxu0 0.0
  %238 = vmatpush2.msra.mxu0 0.0
  %239 = vmatprep.subr.mxu0 0.0
  %240 = vmatpush2.msra.mxu0 0.0
  %241 = vmatprep.subr.mxu0 0.0
  %242 = vmatpush2.msra.mxu0 0.0
  %243 = vmatprep.subr.mxu0 0.0
  %244 = vmatpush2.msra.mxu0 0.0
  %245 = vmatprep.subr.mxu0 0.0
  %246 = vmatpush2.msra.mxu0 0.0
  %247 = vmatprep.subr.mxu0 0.0
  %248 = vmatpush2.msra.mxu0 0.0
  %249 = vmatprep.subr.mxu0 0.0
  %250 = vmatpush2.msra.mxu0 0.0
  %251 = vmatprep.subr.mxu0 0.0
  %252 = vmatpush2.msra.mxu0 0.0
  %253 = vmatprep.subr.mxu0 0.0
  %254 = vmatpush2.msra.mxu0 0.0
  %255 = vmatprep.subr.mxu0 0.0
  %256 = vmatpush2.msra.mxu0 0.0
  %257 = vmatprep.subr.mxu0 0.0
  %258 = vmatpush2.msra.mxu0 0.0
  %259 = vmatprep.subr.mxu0 0.0
  %260 = vmatpush2.msra.mxu0 0.0
  %261 = vmatprep.subr.mxu0 0.0
  %262 = vmatpush2.msra.mxu0 0.0
  %263 = vmatprep.subr.mxu0 0.0
  %264 = vmatpush2.msra.mxu0 0.0
  %265 = vmatprep.subr.mxu0 0.0
  %266 = vmatpush2.msra.mxu0 0.0
  %267 = vmatprep.mubr.f32.mxu0 0.0
  %v268 = vand.u32 %v39, 4294901760
  %v269 = vsub.f32 %v39, %v268
  %270 = vmatmul.mubr.f32.gmra.mxu0 %v269
  %v271 = vpop.f32.mrf.mxu0
  %v272 = vadd.f32 %v196, %v271
  %v273 = vpop.f32.mrf.mxu0
  %274 = vdwg.mxu0
  %275 = vmatprep.subr.mxu0 0.0
  %276 = vmatpush1.msra.mxu0 0.0
  %277 = vmatprep.subr.mxu0 0.0
  %278 = vmatpush1.msra.mxu0 0.0
  %279 = vmatprep.subr.mxu0 0.0
  %280 = vmatpush1.msra.mxu0 0.0
  %281 = vmatprep.subr.mxu0 0.0
  %282 = vmatpush1.msra.mxu0 0.0
  %283 = vmatprep.subr.mxu0 0.0
  %284 = vmatpush1.msra.mxu0 0.0
  %285 = vmatprep.subr.mxu0 0.0
  %286 = vmatpush1.msra.mxu0 0.0
  %287 = vmatprep.subr.mxu0 0.0
  %288 = vmatpush1.msra.mxu0 0.0
  %289 = vmatprep.subr.mxu0 0.0
  %290 = vmatpush1.msra.mxu0 0.0
  %291 = vmatprep.subr.mxu0 0.0
  %292 = vmatpush1.msra.mxu0 0.0
  %293 = vmatprep.subr.mxu0 0.0
  %294 = vmatpush1.msra.mxu0 0.0
  %295 = vmatprep.subr.mxu0 0.0
  %296 = vmatpush1.msra.mxu0 0.0
  %297 = vmatprep.subr.mxu0 0.0
  %298 = vmatpush1.msra.mxu0 0.0
  %299 = vmatprep.subr.mxu0 0.0
  %300 = vmatpush1.msra.mxu0 0.0
  %301 = vmatprep.subr.mxu0 0.0
  %302 = vmatpush1.msra.mxu0 0.0
  %303 = vmatprep.subr.mxu0 0.0
  %v304 = vand.u32 %v36, 4294901760
  %305 = vmatpush1.msra.mxu0 %v304
  %306 = vmatprep.subr.mxu0 0.0
  %v307 = vand.u32 %v35, 4294901760
  %308 = vmatpush1.msra.mxu0 %v307
  %309 = vmatprep.subr.mxu0 0.0
  %310 = vmatpush2.msra.mxu0 0.0
  %311 = vmatprep.subr.mxu0 0.0
  %312 = vmatpush2.msra.mxu0 0.0
  %313 = vmatprep.subr.mxu0 0.0
  %314 = vmatpush2.msra.mxu0 0.0
  %315 = vmatprep.subr.mxu0 0.0
  %316 = vmatpush2.msra.mxu0 0.0
  %317 = vmatprep.subr.mxu0 0.0
  %318 = vmatpush2.msra.mxu0 0.0
  %319 = vmatprep.subr.mxu0 0.0
  %320 = vmatpush2.msra.mxu0 0.0
  %321 = vmatprep.subr.mxu0 0.0
  %322 = vmatpush2.msra.mxu0 0.0
  %323 = vmatprep.subr.mxu0 0.0
  %324 = vmatpush2.msra.mxu0 0.0
  %325 = vmatprep.subr.mxu0 0.0
  %326 = vmatpush2.msra.mxu0 0.0
  %327 = vmatprep.subr.mxu0 0.0
  %328 = vmatpush2.msra.mxu0 0.0
  %329 = vmatprep.subr.mxu0 0.0
  %330 = vmatpush2.msra.mxu0 0.0
  %331 = vmatprep.subr.mxu0 0.0
  %332 = vmatpush2.msra.mxu0 0.0
  %333 = vmatprep.subr.mxu0 0.0
  %334 = vmatpush2.msra.mxu0 0.0
  %335 = vmatprep.subr.mxu0 0.0
  %336 = vmatpush2.msra.mxu0 0.0
  %337 = vmatprep.subr.mxu0 0.0
  %338 = vmatpush2.msra.mxu0 0.0
  %339 = vmatprep.subr.mxu0 0.0
  %340 = vmatpush2.msra.mxu0 0.0
  %341 = vmatprep.mubr.f32.mxu0 0.0
  %v342 = vand.u32 %v39, 4294901760
  %v343 = vsub.f32 %v39, %v342
  %v344 = vand.u32 %v343, 4294901760
  %345 = vmatmul.mubr.f32.gmra.mxu0 %v344
  %v346 = vpop.f32.mrf.mxu0
  %v347 = vadd.f32 %v272, %v346
  %v348 = vpop.f32.mrf.mxu0
  %349 = vdwg.mxu0
  %350 = vmatprep.subr.mxu0 0.0
  %351 = vmatpush1.msra.mxu0 0.0
  %352 = vmatprep.subr.mxu0 0.0
  %353 = vmatpush1.msra.mxu0 0.0
  %354 = vmatprep.subr.mxu0 0.0
  %355 = vmatpush1.msra.mxu0 0.0
  %356 = vmatprep.subr.mxu0 0.0
  %357 = vmatpush1.msra.mxu0 0.0
  %358 = vmatprep.subr.mxu0 0.0
  %359 = vmatpush1.msra.mxu0 0.0
  %360 = vmatprep.subr.mxu0 0.0
  %361 = vmatpush1.msra.mxu0 0.0
  %362 = vmatprep.subr.mxu0 0.0
  %363 = vmatpush1.msra.mxu0 0.0
  %364 = vmatprep.subr.mxu0 0.0
  %365 = vmatpush1.msra.mxu0 0.0
  %366 = vmatprep.subr.mxu0 0.0
  %367 = vmatpush1.msra.mxu0 0.0
  %368 = vmatprep.subr.mxu0 0.0
  %369 = vmatpush1.msra.mxu0 0.0
  %370 = vmatprep.subr.mxu0 0.0
  %371 = vmatpush1.msra.mxu0 0.0
  %372 = vmatprep.subr.mxu0 0.0
  %373 = vmatpush1.msra.mxu0 0.0
  %374 = vmatprep.subr.mxu0 0.0
  %375 = vmatpush1.msra.mxu0 0.0
  %376 = vmatprep.subr.mxu0 0.0
  %377 = vmatpush1.msra.mxu0 0.0
  %378 = vmatprep.subr.mxu0 0.0
  %v379 = vand.u32 %v36, 4294901760
  %v380 = vsub.f32 %v36, %v379
  %v381 = vand.u32 %v380, 4294901760
  %382 = vmatpush1.msra.mxu0 %v381
  %383 = vmatprep.subr.mxu0 0.0
  %v384 = vand.u32 %v35, 4294901760
  %v385 = vsub.f32 %v35, %v384
  %v386 = vand.u32 %v385, 4294901760
  %387 = vmatpush1.msra.mxu0 %v386
  %388 = vmatprep.subr.mxu0 0.0
  %389 = vmatpush2.msra.mxu0 0.0
  %390 = vmatprep.subr.mxu0 0.0
  %391 = vmatpush2.msra.mxu0 0.0
  %392 = vmatprep.subr.mxu0 0.0
  %393 = vmatpush2.msra.mxu0 0.0
  %394 = vmatprep.subr.mxu0 0.0
  %395 = vmatpush2.msra.mxu0 0.0
  %396 = vmatprep.subr.mxu0 0.0
  %397 = vmatpush2.msra.mxu0 0.0
  %398 = vmatprep.subr.mxu0 0.0
  %399 = vmatpush2.msra.mxu0 0.0
  %400 = vmatprep.subr.mxu0 0.0
  %401 = vmatpush2.msra.mxu0 0.0
  %402 = vmatprep.subr.mxu0 0.0
  %403 = vmatpush2.msra.mxu0 0.0
  %404 = vmatprep.subr.mxu0 0.0
  %405 = vmatpush2.msra.mxu0 0.0
  %406 = vmatprep.subr.mxu0 0.0
  %407 = vmatpush2.msra.mxu0 0.0
  %408 = vmatprep.subr.mxu0 0.0
  %409 = vmatpush2.msra.mxu0 0.0
  %410 = vmatprep.subr.mxu0 0.0
  %411 = vmatpush2.msra.mxu0 0.0
  %412 = vmatprep.subr.mxu0 0.0
  %413 = vmatpush2.msra.mxu0 0.0
  %414 = vmatprep.subr.mxu0 0.0
  %415 = vmatpush2.msra.mxu0 0.0
  %416 = vmatprep.subr.mxu0 0.0
  %417 = vmatpush2.msra.mxu0 0.0
  %418 = vmatprep.subr.mxu0 0.0
  %419 = vmatpush2.msra.mxu0 0.0
  %420 = vmatprep.mubr.f32.mxu0 0.0
  %v421 = vand.u32 %v39, 4294901760
  %422 = vmatmul.mubr.f32.gmra.mxu0 %v421
  %v423 = vpop.f32.mrf.mxu0
  %v424 = vadd.f32 %v347, %v423
  %v425 = vpop.f32.mrf.mxu0
  %426 = vdwg.mxu0
  %427 = vmatprep.subr.mxu0 0.0
  %428 = vmatpush1.msra.mxu0 0.0
  %429 = vmatprep.subr.mxu0 0.0
  %430 = vmatpush1.msra.mxu0 0.0
  %431 = vmatprep.subr.mxu0 0.0
  %432 = vmatpush1.msra.mxu0 0.0
  %433 = vmatprep.subr.mxu0 0.0
  %434 = vmatpush1.msra.mxu0 0.0
  %435 = vmatprep.subr.mxu0 0.0
  %436 = vmatpush1.msra.mxu0 0.0
  %437 = vmatprep.subr.mxu0 0.0
  %438 = vmatpush1.msra.mxu0 0.0
  %439 = vmatprep.subr.mxu0 0.0
  %440 = vmatpush1.msra.mxu0 0.0
  %441 = vmatprep.subr.mxu0 0.0
  %442 = vmatpush1.msra.mxu0 0.0
  %443 = vmatprep.subr.mxu0 0.0
  %444 = vmatpush1.msra.mxu0 0.0
  %445 = vmatprep.subr.mxu0 0.0
  %446 = vmatpush1.msra.mxu0 0.0
  %447 = vmatprep.subr.mxu0 0.0
  %448 = vmatpush1.msra.mxu0 0.0
  %449 = vmatprep.subr.mxu0 0.0
  %450 = vmatpush1.msra.mxu0 0.0
  %451 = vmatprep.subr.mxu0 0.0
  %452 = vmatpush1.msra.mxu0 0.0
  %453 = vmatprep.subr.mxu0 0.0
  %454 = vmatpush1.msra.mxu0 0.0
  %455 = vmatprep.subr.mxu0 0.0
  %v456 = vand.u32 %v36, 4294901760
  %457 = vmatpush1.msra.mxu0 %v456
  %458 = vmatprep.subr.mxu0 0.0
  %v459 = vand.u32 %v35, 4294901760
  %460 = vmatpush1.msra.mxu0 %v459
  %461 = vmatprep.subr.mxu0 0.0
  %462 = vmatpush2.msra.mxu0 0.0
  %463 = vmatprep.subr.mxu0 0.0
  %464 = vmatpush2.msra.mxu0 0.0
  %465 = vmatprep.subr.mxu0 0.0
  %466 = vmatpush2.msra.mxu0 0.0
  %467 = vmatprep.subr.mxu0 0.0
  %468 = vmatpush2.msra.mxu0 0.0
  %469 = vmatprep.subr.mxu0 0.0
  %470 = vmatpush2.msra.mxu0 0.0
  %471 = vmatprep.subr.mxu0 0.0
  %472 = vmatpush2.msra.mxu0 0.0
  %473 = vmatprep.subr.mxu0 0.0
  %474 = vmatpush2.msra.mxu0 0.0
  %475 = vmatprep.subr.mxu0 0.0
  %476 = vmatpush2.msra.mxu0 0.0
  %477 = vmatprep.subr.mxu0 0.0
  %478 = vmatpush2.msra.mxu0 0.0
  %479 = vmatprep.subr.mxu0 0.0
  %480 = vmatpush2.msra.mxu0 0.0
  %481 = vmatprep.subr.mxu0 0.0
  %482 = vmatpush2.msra.mxu0 0.0
  %483 = vmatprep.subr.mxu0 0.0
  %484 = vmatpush2.msra.mxu0 0.0
  %485 = vmatprep.subr.mxu0 0.0
  %486 = vmatpush2.msra.mxu0 0.0
  %487 = vmatprep.subr.mxu0 0.0
  %488 = vmatpush2.msra.mxu0 0.0
  %489 = vmatprep.subr.mxu0 0.0
  %490 = vmatpush2.msra.mxu0 0.0
  %491 = vmatprep.subr.mxu0 0.0
  %492 = vmatpush2.msra.mxu0 0.0
  %493 = vmatprep.mubr.f32.mxu0 0.0
  %v494 = vand.u32 %v39, 4294901760
  %495 = vmatmul.mubr.f32.gmra.mxu0 %v494
  %v496 = vpop.f32.mrf.mxu0
  %v497 = vadd.f32 %v424, %v496
  %v498 = vpop.f32.mrf.mxu0
  %499 = vdwg.mxu0
  %v500 = vadd.s32 %v25, 16
  %v501 = vlaneseq
  %v502 = vshrl.u32 %v501, 7
  %v503 = vsub.s32 0, %v502
  %v504 = vrot.slane %v21, %v503
  %vm505 = vcmp.eq.s32.totalorder %v25, %v504
  %vm506 = vcmp.eq.s32.totalorder %v26, %v504
  %vm507 = vcmp.eq.s32.totalorder %v500, %v504
  %v508 = vsel %vm505, 1, 0
  %v509 = vsel %vm506, 1, 0
  %v510 = vsel %vm507, 1, 0
  %v511 = vcvt.s32.f32 %v508
  %v512 = vcvt.s32.f32 %v509
  %v513 = vcvt.s32.f32 %v510
  %vm514 = vcmask 195584
  %v516 = vsel %vm514, %v23, 0
  %518 = vmatprep.subr.mxu0 0.0
  %519 = vmatpush1.msra.mxu0 0.0
  %520 = vmatprep.subr.mxu0 0.0
  %521 = vmatpush1.msra.mxu0 0.0
  %522 = vmatprep.subr.mxu0 0.0
  %523 = vmatpush1.msra.mxu0 0.0
  %524 = vmatprep.subr.mxu0 0.0
  %525 = vmatpush1.msra.mxu0 0.0
  %526 = vmatprep.subr.mxu0 0.0
  %527 = vmatpush1.msra.mxu0 0.0
  %528 = vmatprep.subr.mxu0 0.0
  %529 = vmatpush1.msra.mxu0 0.0
  %530 = vmatprep.subr.mxu0 0.0
  %531 = vmatpush1.msra.mxu0 0.0
  %532 = vmatprep.subr.mxu0 0.0
  %533 = vmatpush1.msra.mxu0 0.0
  %534 = vmatprep.subr.mxu0 0.0
  %535 = vmatpush1.msra.mxu0 0.0
  %536 = vmatprep.subr.mxu0 0.0
  %537 = vmatpush1.msra.mxu0 0.0
  %538 = vmatprep.subr.mxu0 0.0
  %539 = vmatpush1.msra.mxu0 0.0
  %540 = vmatprep.subr.mxu0 0.0
  %541 = vmatpush1.msra.mxu0 0.0
  %542 = vmatprep.subr.mxu0 0.0
  %543 = vmatpush1.msra.mxu0 0.0
  %544 = vmatprep.subr.mxu0 0.0
  %v545 = vand.u32 %v513, 4294901760
  %546 = vmatpush1.msra.mxu0 %v545
  %547 = vmatprep.subr.mxu0 0.0
  %v548 = vand.u32 %v512, 4294901760
  %549 = vmatpush1.msra.mxu0 %v548
  %550 = vmatprep.subr.mxu0 0.0
  %v551 = vand.u32 %v511, 4294901760
  %552 = vmatpush1.msra.mxu0 %v551
  %553 = vmatprep.subr.mxu0 0.0
  %554 = vmatpush2.msra.mxu0 0.0
  %555 = vmatprep.subr.mxu0 0.0
  %556 = vmatpush2.msra.mxu0 0.0
  %557 = vmatprep.subr.mxu0 0.0
  %558 = vmatpush2.msra.mxu0 0.0
  %559 = vmatprep.subr.mxu0 0.0
  %560 = vmatpush2.msra.mxu0 0.0
  %561 = vmatprep.subr.mxu0 0.0
  %562 = vmatpush2.msra.mxu0 0.0
  %563 = vmatprep.subr.mxu0 0.0
  %564 = vmatpush2.msra.mxu0 0.0
  %565 = vmatprep.subr.mxu0 0.0
  %566 = vmatpush2.msra.mxu0 0.0
  %567 = vmatprep.subr.mxu0 0.0
  %568 = vmatpush2.msra.mxu0 0.0
  %569 = vmatprep.subr.mxu0 0.0
  %570 = vmatpush2.msra.mxu0 0.0
  %571 = vmatprep.subr.mxu0 0.0
  %572 = vmatpush2.msra.mxu0 0.0
  %573 = vmatprep.subr.mxu0 0.0
  %574 = vmatpush2.msra.mxu0 0.0
  %575 = vmatprep.subr.mxu0 0.0
  %576 = vmatpush2.msra.mxu0 0.0
  %577 = vmatprep.subr.mxu0 0.0
  %578 = vmatpush2.msra.mxu0 0.0
  %579 = vmatprep.subr.mxu0 0.0
  %580 = vmatpush2.msra.mxu0 0.0
  %581 = vmatprep.subr.mxu0 0.0
  %582 = vmatpush2.msra.mxu0 0.0
  %583 = vmatprep.subr.mxu0 0.0
  %584 = vmatpush2.msra.mxu0 0.0
  %585 = vmatprep.mubr.f32.mxu0 0.0
  %v586 = vand.u32 %v516, 4294901760
  %v587 = vsub.f32 %v516, %v586
  %v588 = vand.u32 %v587, 4294901760
  %v589 = vsub.f32 %v587, %v588
  %v590 = vand.u32 %v589, 4294901760
  %591 = vmatmul.mubr.f32.gmra.mxu0 %v590
  %v592 = vpop.f32.mrf.mxu0
  %v593 = vadd.f32 0.0, %v592
  %v594 = vpop.f32.mrf.mxu0
  %595 = vdwg.mxu0
  %596 = vmatprep.subr.mxu0 0.0
  %597 = vmatpush1.msra.mxu0 0.0
  %598 = vmatprep.subr.mxu0 0.0
  %599 = vmatpush1.msra.mxu0 0.0
  %600 = vmatprep.subr.mxu0 0.0
  %601 = vmatpush1.msra.mxu0 0.0
  %602 = vmatprep.subr.mxu0 0.0
  %603 = vmatpush1.msra.mxu0 0.0
  %604 = vmatprep.subr.mxu0 0.0
  %605 = vmatpush1.msra.mxu0 0.0
  %606 = vmatprep.subr.mxu0 0.0
  %607 = vmatpush1.msra.mxu0 0.0
  %608 = vmatprep.subr.mxu0 0.0
  %609 = vmatpush1.msra.mxu0 0.0
  %610 = vmatprep.subr.mxu0 0.0
  %611 = vmatpush1.msra.mxu0 0.0
  %612 = vmatprep.subr.mxu0 0.0
  %613 = vmatpush1.msra.mxu0 0.0
  %614 = vmatprep.subr.mxu0 0.0
  %615 = vmatpush1.msra.mxu0 0.0
  %616 = vmatprep.subr.mxu0 0.0
  %617 = vmatpush1.msra.mxu0 0.0
  %618 = vmatprep.subr.mxu0 0.0
  %619 = vmatpush1.msra.mxu0 0.0
  %620 = vmatprep.subr.mxu0 0.0
  %621 = vmatpush1.msra.mxu0 0.0
  %622 = vmatprep.subr.mxu0 0.0
  %v623 = vand.u32 %v513, 4294901760
  %v624 = vsub.f32 %v513, %v623
  %v625 = vand.u32 %v624, 4294901760
  %v626 = vsub.f32 %v624, %v625
  %v627 = vand.u32 %v626, 4294901760
  %628 = vmatpush1.msra.mxu0 %v627
  %629 = vmatprep.subr.mxu0 0.0
  %v630 = vand.u32 %v512, 4294901760
  %v631 = vsub.f32 %v512, %v630
  %v632 = vand.u32 %v631, 4294901760
  %v633 = vsub.f32 %v631, %v632
  %v634 = vand.u32 %v633, 4294901760
  %635 = vmatpush1.msra.mxu0 %v634
  %636 = vmatprep.subr.mxu0 0.0
  %v637 = vand.u32 %v511, 4294901760
  %v638 = vsub.f32 %v511, %v637
  %v639 = vand.u32 %v638, 4294901760
  %v640 = vsub.f32 %v638, %v639
  %v641 = vand.u32 %v640, 4294901760
  %642 = vmatpush1.msra.mxu0 %v641
  %643 = vmatprep.subr.mxu0 0.0
  %644 = vmatpush2.msra.mxu0 0.0
  %645 = vmatprep.subr.mxu0 0.0
  %646 = vmatpush2.msra.mxu0 0.0
  %647 = vmatprep.subr.mxu0 0.0
  %648 = vmatpush2.msra.mxu0 0.0
  %649 = vmatprep.subr.mxu0 0.0
  %650 = vmatpush2.msra.mxu0 0.0
  %651 = vmatprep.subr.mxu0 0.0
  %652 = vmatpush2.msra.mxu0 0.0
  %653 = vmatprep.subr.mxu0 0.0
  %654 = vmatpush2.msra.mxu0 0.0
  %655 = vmatprep.subr.mxu0 0.0
  %656 = vmatpush2.msra.mxu0 0.0
  %657 = vmatprep.subr.mxu0 0.0
  %658 = vmatpush2.msra.mxu0 0.0
  %659 = vmatprep.subr.mxu0 0.0
  %660 = vmatpush2.msra.mxu0 0.0
  %661 = vmatprep.subr.mxu0 0.0
  %662 = vmatpush2.msra.mxu0 0.0
  %663 = vmatprep.subr.mxu0 0.0
  %664 = vmatpush2.msra.mxu0 0.0
  %665 = vmatprep.subr.mxu0 0.0
  %666 = vmatpush2.msra.mxu0 0.0
  %667 = vmatprep.subr.mxu0 0.0
  %668 = vmatpush2.msra.mxu0 0.0
  %669 = vmatprep.subr.mxu0 0.0
  %670 = vmatpush2.msra.mxu0 0.0
  %671 = vmatprep.subr.mxu0 0.0
  %672 = vmatpush2.msra.mxu0 0.0
  %673 = vmatprep.subr.mxu0 0.0
  %674 = vmatpush2.msra.mxu0 0.0
  %675 = vmatprep.mubr.f32.mxu0 0.0
  %v676 = vand.u32 %v516, 4294901760
  %677 = vmatmul.mubr.f32.gmra.mxu0 %v676
  %v678 = vpop.f32.mrf.mxu0
  %v679 = vadd.f32 %v593, %v678
  %v680 = vpop.f32.mrf.mxu0
  %681 = vdwg.mxu0
  %682 = vmatprep.subr.mxu0 0.0
  %683 = vmatpush1.msra.mxu0 0.0
  %684 = vmatprep.subr.mxu0 0.0
  %685 = vmatpush1.msra.mxu0 0.0
  %686 = vmatprep.subr.mxu0 0.0
  %687 = vmatpush1.msra.mxu0 0.0
  %688 = vmatprep.subr.mxu0 0.0
  %689 = vmatpush1.msra.mxu0 0.0
  %690 = vmatprep.subr.mxu0 0.0
  %691 = vmatpush1.msra.mxu0 0.0
  %692 = vmatprep.subr.mxu0 0.0
  %693 = vmatpush1.msra.mxu0 0.0
  %694 = vmatprep.subr.mxu0 0.0
  %695 = vmatpush1.msra.mxu0 0.0
  %696 = vmatprep.subr.mxu0 0.0
  %697 = vmatpush1.msra.mxu0 0.0
  %698 = vmatprep.subr.mxu0 0.0
  %699 = vmatpush1.msra.mxu0 0.0
  %700 = vmatprep.subr.mxu0 0.0
  %701 = vmatpush1.msra.mxu0 0.0
  %702 = vmatprep.subr.mxu0 0.0
  %703 = vmatpush1.msra.mxu0 0.0
  %704 = vmatprep.subr.mxu0 0.0
  %705 = vmatpush1.msra.mxu0 0.0
  %706 = vmatprep.subr.mxu0 0.0
  %707 = vmatpush1.msra.mxu0 0.0
  %708 = vmatprep.subr.mxu0 0.0
  %v709 = vand.u32 %v513, 4294901760
  %v710 = vsub.f32 %v513, %v709
  %711 = vmatpush1.msra.mxu0 %v710
  %712 = vmatprep.subr.mxu0 0.0
  %v713 = vand.u32 %v512, 4294901760
  %v714 = vsub.f32 %v512, %v713
  %715 = vmatpush1.msra.mxu0 %v714
  %716 = vmatprep.subr.mxu0 0.0
  %v717 = vand.u32 %v511, 4294901760
  %v718 = vsub.f32 %v511, %v717
  %719 = vmatpush1.msra.mxu0 %v718
  %720 = vmatprep.subr.mxu0 0.0
  %721 = vmatpush2.msra.mxu0 0.0
  %722 = vmatprep.subr.mxu0 0.0
  %723 = vmatpush2.msra.mxu0 0.0
  %724 = vmatprep.subr.mxu0 0.0
  %725 = vmatpush2.msra.mxu0 0.0
  %726 = vmatprep.subr.mxu0 0.0
  %727 = vmatpush2.msra.mxu0 0.0
  %728 = vmatprep.subr.mxu0 0.0
  %729 = vmatpush2.msra.mxu0 0.0
  %730 = vmatprep.subr.mxu0 0.0
  %731 = vmatpush2.msra.mxu0 0.0
  %732 = vmatprep.subr.mxu0 0.0
  %733 = vmatpush2.msra.mxu0 0.0
  %734 = vmatprep.subr.mxu0 0.0
  %735 = vmatpush2.msra.mxu0 0.0
  %736 = vmatprep.subr.mxu0 0.0
  %737 = vmatpush2.msra.mxu0 0.0
  %738 = vmatprep.subr.mxu0 0.0
  %739 = vmatpush2.msra.mxu0 0.0
  %740 = vmatprep.subr.mxu0 0.0
  %741 = vmatpush2.msra.mxu0 0.0
  %742 = vmatprep.subr.mxu0 0.0
  %743 = vmatpush2.msra.mxu0 0.0
  %744 = vmatprep.subr.mxu0 0.0
  %745 = vmatpush2.msra.mxu0 0.0
  %746 = vmatprep.subr.mxu0 0.0
  %747 = vmatpush2.msra.mxu0 0.0
  %748 = vmatprep.subr.mxu0 0.0
  %749 = vmatpush2.msra.mxu0 0.0
  %750 = vmatprep.subr.mxu0 0.0
  %751 = vmatpush2.msra.mxu0 0.0
  %752 = vmatprep.mubr.f32.mxu0 0.0
  %v753 = vand.u32 %v516, 4294901760
  %v754 = vsub.f32 %v516, %v753
  %755 = vmatmul.mubr.f32.gmra.mxu0 %v754
  %v756 = vpop.f32.mrf.mxu0
  %v757 = vadd.f32 %v679, %v756
  %v758 = vpop.f32.mrf.mxu0
  %759 = vdwg.mxu0
  %760 = vmatprep.subr.mxu0 0.0
  %761 = vmatpush1.msra.mxu0 0.0
  %762 = vmatprep.subr.mxu0 0.0
  %763 = vmatpush1.msra.mxu0 0.0
  %764 = vmatprep.subr.mxu0 0.0
  %765 = vmatpush1.msra.mxu0 0.0
  %766 = vmatprep.subr.mxu0 0.0
  %767 = vmatpush1.msra.mxu0 0.0
  %768 = vmatprep.subr.mxu0 0.0
  %769 = vmatpush1.msra.mxu0 0.0
  %770 = vmatprep.subr.mxu0 0.0
  %771 = vmatpush1.msra.mxu0 0.0
  %772 = vmatprep.subr.mxu0 0.0
  %773 = vmatpush1.msra.mxu0 0.0
  %774 = vmatprep.subr.mxu0 0.0
  %775 = vmatpush1.msra.mxu0 0.0
  %776 = vmatprep.subr.mxu0 0.0
  %777 = vmatpush1.msra.mxu0 0.0
  %778 = vmatprep.subr.mxu0 0.0
  %779 = vmatpush1.msra.mxu0 0.0
  %780 = vmatprep.subr.mxu0 0.0
  %781 = vmatpush1.msra.mxu0 0.0
  %782 = vmatprep.subr.mxu0 0.0
  %783 = vmatpush1.msra.mxu0 0.0
  %784 = vmatprep.subr.mxu0 0.0
  %785 = vmatpush1.msra.mxu0 0.0
  %786 = vmatprep.subr.mxu0 0.0
  %v787 = vand.u32 %v513, 4294901760
  %788 = vmatpush1.msra.mxu0 %v787
  %789 = vmatprep.subr.mxu0 0.0
  %v790 = vand.u32 %v512, 4294901760
  %791 = vmatpush1.msra.mxu0 %v790
  %792 = vmatprep.subr.mxu0 0.0
  %v793 = vand.u32 %v511, 4294901760
  %794 = vmatpush1.msra.mxu0 %v793
  %795 = vmatprep.subr.mxu0 0.0
  %796 = vmatpush2.msra.mxu0 0.0
  %797 = vmatprep.subr.mxu0 0.0
  %798 = vmatpush2.msra.mxu0 0.0
  %799 = vmatprep.subr.mxu0 0.0
  %800 = vmatpush2.msra.mxu0 0.0
  %801 = vmatprep.subr.mxu0 0.0
  %802 = vmatpush2.msra.mxu0 0.0
  %803 = vmatprep.subr.mxu0 0.0
  %804 = vmatpush2.msra.mxu0 0.0
  %805 = vmatprep.subr.mxu0 0.0
  %806 = vmatpush2.msra.mxu0 0.0
  %807 = vmatprep.subr.mxu0 0.0
  %808 = vmatpush2.msra.mxu0 0.0
  %809 = vmatprep.subr.mxu0 0.0
  %810 = vmatpush2.msra.mxu0 0.0
  %811 = vmatprep.subr.mxu0 0.0
  %812 = vmatpush2.msra.mxu0 0.0
  %813 = vmatprep.subr.mxu0 0.0
  %814 = vmatpush2.msra.mxu0 0.0
  %815 = vmatprep.subr.mxu0 0.0
  %816 = vmatpush2.msra.mxu0 0.0
  %817 = vmatprep.subr.mxu0 0.0
  %818 = vmatpush2.msra.mxu0 0.0
  %819 = vmatprep.subr.mxu0 0.0
  %820 = vmatpush2.msra.mxu0 0.0
  %821 = vmatprep.subr.mxu0 0.0
  %822 = vmatpush2.msra.mxu0 0.0
  %823 = vmatprep.subr.mxu0 0.0
  %824 = vmatpush2.msra.mxu0 0.0
  %825 = vmatprep.subr.mxu0 0.0
  %826 = vmatpush2.msra.mxu0 0.0
  %827 = vmatprep.mubr.f32.mxu0 0.0
  %v828 = vand.u32 %v516, 4294901760
  %v829 = vsub.f32 %v516, %v828
  %v830 = vand.u32 %v829, 4294901760
  %831 = vmatmul.mubr.f32.gmra.mxu0 %v830
  %v832 = vpop.f32.mrf.mxu0
  %v833 = vadd.f32 %v757, %v832
  %v834 = vpop.f32.mrf.mxu0
  %835 = vdwg.mxu0
  %836 = vmatprep.subr.mxu0 0.0
  %837 = vmatpush1.msra.mxu0 0.0
  %838 = vmatprep.subr.mxu0 0.0
  %839 = vmatpush1.msra.mxu0 0.0
  %840 = vmatprep.subr.mxu0 0.0
  %841 = vmatpush1.msra.mxu0 0.0
  %842 = vmatprep.subr.mxu0 0.0
  %843 = vmatpush1.msra.mxu0 0.0
  %844 = vmatprep.subr.mxu0 0.0
  %845 = vmatpush1.msra.mxu0 0.0
  %846 = vmatprep.subr.mxu0 0.0
  %847 = vmatpush1.msra.mxu0 0.0
  %848 = vmatprep.subr.mxu0 0.0
  %849 = vmatpush1.msra.mxu0 0.0
  %850 = vmatprep.subr.mxu0 0.0
  %851 = vmatpush1.msra.mxu0 0.0
  %852 = vmatprep.subr.mxu0 0.0
  %853 = vmatpush1.msra.mxu0 0.0
  %854 = vmatprep.subr.mxu0 0.0
  %855 = vmatpush1.msra.mxu0 0.0
  %856 = vmatprep.subr.mxu0 0.0
  %857 = vmatpush1.msra.mxu0 0.0
  %858 = vmatprep.subr.mxu0 0.0
  %859 = vmatpush1.msra.mxu0 0.0
  %860 = vmatprep.subr.mxu0 0.0
  %861 = vmatpush1.msra.mxu0 0.0
  %862 = vmatprep.subr.mxu0 0.0
  %v863 = vand.u32 %v513, 4294901760
  %v864 = vsub.f32 %v513, %v863
  %v865 = vand.u32 %v864, 4294901760
  %866 = vmatpush1.msra.mxu0 %v865
  %867 = vmatprep.subr.mxu0 0.0
  %v868 = vand.u32 %v512, 4294901760
  %v869 = vsub.f32 %v512, %v868
  %v870 = vand.u32 %v869, 4294901760
  %871 = vmatpush1.msra.mxu0 %v870
  %872 = vmatprep.subr.mxu0 0.0
  %v873 = vand.u32 %v511, 4294901760
  %v874 = vsub.f32 %v511, %v873
  %v875 = vand.u32 %v874, 4294901760
  %876 = vmatpush1.msra.mxu0 %v875
  %877 = vmatprep.subr.mxu0 0.0
  %878 = vmatpush2.msra.mxu0 0.0
  %879 = vmatprep.subr.mxu0 0.0
  %880 = vmatpush2.msra.mxu0 0.0
  %881 = vmatprep.subr.mxu0 0.0
  %882 = vmatpush2.msra.mxu0 0.0
  %883 = vmatprep.subr.mxu0 0.0
  %884 = vmatpush2.msra.mxu0 0.0
  %885 = vmatprep.subr.mxu0 0.0
  %886 = vmatpush2.msra.mxu0 0.0
  %887 = vmatprep.subr.mxu0 0.0
  %888 = vmatpush2.msra.mxu0 0.0
  %889 = vmatprep.subr.mxu0 0.0
  %890 = vmatpush2.msra.mxu0 0.0
  %891 = vmatprep.subr.mxu0 0.0
  %892 = vmatpush2.msra.mxu0 0.0
  %893 = vmatprep.subr.mxu0 0.0
  %894 = vmatpush2.msra.mxu0 0.0
  %895 = vmatprep.subr.mxu0 0.0
  %896 = vmatpush2.msra.mxu0 0.0
  %897 = vmatprep.subr.mxu0 0.0
  %898 = vmatpush2.msra.mxu0 0.0
  %899 = vmatprep.subr.mxu0 0.0
  %900 = vmatpush2.msra.mxu0 0.0
  %901 = vmatprep.subr.mxu0 0.0
  %902 = vmatpush2.msra.mxu0 0.0
  %903 = vmatprep.subr.mxu0 0.0
  %904 = vmatpush2.msra.mxu0 0.0
  %905 = vmatprep.subr.mxu0 0.0
  %906 = vmatpush2.msra.mxu0 0.0
  %907 = vmatprep.subr.mxu0 0.0
  %908 = vmatpush2.msra.mxu0 0.0
  %909 = vmatprep.mubr.f32.mxu0 0.0
  %v910 = vand.u32 %v516, 4294901760
  %911 = vmatmul.mubr.f32.gmra.mxu0 %v910
  %v912 = vpop.f32.mrf.mxu0
  %v913 = vadd.f32 %v833, %v912
  %v914 = vpop.f32.mrf.mxu0
  %915 = vdwg.mxu0
  %916 = vmatprep.subr.mxu0 0.0
  %917 = vmatpush1.msra.mxu0 0.0
  %918 = vmatprep.subr.mxu0 0.0
  %919 = vmatpush1.msra.mxu0 0.0
  %920 = vmatprep.subr.mxu0 0.0
  %921 = vmatpush1.msra.mxu0 0.0
  %922 = vmatprep.subr.mxu0 0.0
  %923 = vmatpush1.msra.mxu0 0.0
  %924 = vmatprep.subr.mxu0 0.0
  %925 = vmatpush1.msra.mxu0 0.0
  %926 = vmatprep.subr.mxu0 0.0
  %927 = vmatpush1.msra.mxu0 0.0
  %928 = vmatprep.subr.mxu0 0.0
  %929 = vmatpush1.msra.mxu0 0.0
  %930 = vmatprep.subr.mxu0 0.0
  %931 = vmatpush1.msra.mxu0 0.0
  %932 = vmatprep.subr.mxu0 0.0
  %933 = vmatpush1.msra.mxu0 0.0
  %934 = vmatprep.subr.mxu0 0.0
  %935 = vmatpush1.msra.mxu0 0.0
  %936 = vmatprep.subr.mxu0 0.0
  %937 = vmatpush1.msra.mxu0 0.0
  %938 = vmatprep.subr.mxu0 0.0
  %939 = vmatpush1.msra.mxu0 0.0
  %940 = vmatprep.subr.mxu0 0.0
  %941 = vmatpush1.msra.mxu0 0.0
  %942 = vmatprep.subr.mxu0 0.0
  %v943 = vand.u32 %v513, 4294901760
  %944 = vmatpush1.msra.mxu0 %v943
  %945 = vmatprep.subr.mxu0 0.0
  %v946 = vand.u32 %v512, 4294901760
  %947 = vmatpush1.msra.mxu0 %v946
  %948 = vmatprep.subr.mxu0 0.0
  %v949 = vand.u32 %v511, 4294901760
  %950 = vmatpush1.msra.mxu0 %v949
  %951 = vmatprep.subr.mxu0 0.0
  %952 = vmatpush2.msra.mxu0 0.0
  %953 = vmatprep.subr.mxu0 0.0
  %954 = vmatpush2.msra.mxu0 0.0
  %955 = vmatprep.subr.mxu0 0.0
  %956 = vmatpush2.msra.mxu0 0.0
  %957 = vmatprep.subr.mxu0 0.0
  %958 = vmatpush2.msra.mxu0 0.0
  %959 = vmatprep.subr.mxu0 0.0
  %960 = vmatpush2.msra.mxu0 0.0
  %961 = vmatprep.subr.mxu0 0.0
  %962 = vmatpush2.msra.mxu0 0.0
  %963 = vmatprep.subr.mxu0 0.0
  %964 = vmatpush2.msra.mxu0 0.0
  %965 = vmatprep.subr.mxu0 0.0
  %966 = vmatpush2.msra.mxu0 0.0
  %967 = vmatprep.subr.mxu0 0.0
  %968 = vmatpush2.msra.mxu0 0.0
  %969 = vmatprep.subr.mxu0 0.0
  %970 = vmatpush2.msra.mxu0 0.0
  %971 = vmatprep.subr.mxu0 0.0
  %972 = vmatpush2.msra.mxu0 0.0
  %973 = vmatprep.subr.mxu0 0.0
  %974 = vmatpush2.msra.mxu0 0.0
  %975 = vmatprep.subr.mxu0 0.0
  %976 = vmatpush2.msra.mxu0 0.0
  %977 = vmatprep.subr.mxu0 0.0
  %978 = vmatpush2.msra.mxu0 0.0
  %979 = vmatprep.subr.mxu0 0.0
  %980 = vmatpush2.msra.mxu0 0.0
  %981 = vmatprep.subr.mxu0 0.0
  %982 = vmatpush2.msra.mxu0 0.0
  %983 = vmatprep.mubr.f32.mxu0 0.0
  %v984 = vand.u32 %v516, 4294901760
  %985 = vmatmul.mubr.f32.gmra.mxu0 %v984
  %v986 = vpop.f32.mrf.mxu0
  %v987 = vadd.f32 %v913, %v986
  %v988 = vpop.f32.mrf.mxu0
  %989 = vdwg.mxu0
  %v990 = vmul.f32 %v497, %v987
  %v991 = vrot.slane %v990, 4
  %v992 = vadd.f32 %v990, %v991
  %v993 = vrot.slane %v992, 2
  %v994 = vadd.f32 %v992, %v993
  %v995 = vrot.slane %v994, 1
  %v996 = vadd.f32 %v994, %v995
  %v997 = vxor.u32 %v996, 2147483648
  %v998 = vmul.f32 %v997, 1.442695
  %v999 = vpow.pop %v998
  %v1000 = vadd.f32 %v999, 1.0
  %v1001 = vrcp.pop %v1000
  %v1002 = vmul.f32 1.0, %v1001
  %1003 = vst [vmem:[%s4] sm:$0x1] %v1002
  %1004 = vst [vmem:[%s5] sm:$0xff] %v497
  %1005 = vst [vmem:[%s6] sm:$0xff] %v987
  // Predicated region
  $region18: #{mf_forward.1} parent=0 // pred_check
    _
  $region19: #{mf_forward.1} parent=0 // pred_check_branch
    %1007 = sbr.rel (0) target = $region21
  $region20: #{mf_forward.1} parent=0 // pred_region
    _
  $region21: #{mf_forward.1} parent=0 // pred_fallthru
    _
  // Predicated region
  $region22: #{mf_forward.1} parent=0 // pred_check
    _
  $region23: #{mf_forward.1} parent=0 // pred_check_branch
    %1009 = sbr.rel (0) target = $region25
  $region24: #{mf_forward.1} parent=0 // pred_region
    _
  $region25: #{mf_forward.1} parent=0 // pred_fallthru
    _
  // Predicated region
  $region26: #{mf_forward.1} parent=0 // pred_check
    _
  $region27: #{mf_forward.1} parent=0 // pred_check_branch
    %1011 = sbr.rel (0) target = $region29
  $region28: #{mf_forward.1} parent=0 // pred_region
    _
  $region29: #{mf_forward.1} parent=0 // pred_fallthru
    _
  // Predicated region
  $region30: #{mf_forward.1} parent=0 // pred_check
    _
  $region31: #{mf_forward.1} parent=0 // pred_check_branch
    %1013 = sbr.rel (0) target = $region33
  $region32: #{mf_forward.1} parent=0 // pred_region
    _
  $region33: #{mf_forward.1} parent=0 // pred_fallthru
    _
  // Predicated region
  $region34: #{mf_forward.1} parent=0 // pred_check
    _
  $region35: #{mf_forward.1} parent=0 // pred_check_branch
    %1015 = sbr.rel (0) target = $region37
  $region36: #{mf_forward.1} parent=0 // pred_region
    _
  $region37: #{mf_forward.1} parent=0 // pred_fallthru
    _
  // Predicated region
  $region38: #{mf_forward.1} parent=0 // pred_check
    _
  $region39: #{mf_forward.1} parent=0 // pred_check_branch
    %1017 = sbr.rel (0) target = $region41
  $region40: #{mf_forward.1} parent=0 // pred_region
    _
  $region41: #{mf_forward.1} parent=0 // pred_fallthru
    _

</llo_original>
